<compile_context>
chip_gen: v6e
topology: v6e:2x2x1
jax: 0.10.0
libtpu: 0.0.40
codegen_flags: <defaults>
</compile_context>

<pallas_src>
import math

import jax
import jax.numpy as jnp
from jax.experimental import pallas as pl
from jax.experimental.pallas import tpu as pltpu


def _round_up(x, n):
    return ((x + n - 1) // n) * n


def _linear_kernel(x_ref, w_ref, b_ref, o_ref):
    # x_ref: [TM, D], w_ref: [D, Npad], b_ref: [1, Npad], o_ref: [TM, Npad]
    acc = jnp.dot(x_ref[...], w_ref[...], preferred_element_type=jnp.float32)
    o_ref[...] = (acc + b_ref[...]).astype(o_ref.dtype)


def mel_pred_forward(x, weight, bias, *, max_tm=1024, compute_dtype=None,
                     return_lane_padded=False):
    """Forward pass of model_mel_pred (nn.Linear over the feature dim).

    x:      [batch, seq, input_dim]  float32
    weight: [input_dim, n_bins]      float32  (transpose of torch .weight)
    bias:   [n_bins]                 float32
    returns [batch, seq, n_bins]     (or [batch, seq, n_bins_padded_to_128]
                                      if return_lane_padded=True)
    """
    batch, seq, input_dim = x.shape
    n_bins = weight.shape[1]
    m = batch * seq
    out_dtype = x.dtype

    # Lane-pad the output dim to a multiple of 128 -> unmasked, lane-dense stores.
    n_pad = _round_up(n_bins, 128)

    # Optional bf16 cast of the streamed operands (halves the dominant HBM
    # read stream on v6e/v7x); f32 accumulation & bias/output regardless.
    in_dtype = jnp.dtype(compute_dtype) if compute_dtype is not None else x.dtype
    sublane = 16 if in_dtype == jnp.bfloat16 else 8

    # No padding / copy of the activation slab: just a metadata reshape.
    x2d = x.reshape(m, input_dim).astype(in_dtype)

    # Weight / bias padding is tiny (D x n_bins); done once per call.
    w_p = weight.astype(in_dtype)
    if n_pad != n_bins:
        w_p = jnp.pad(w_p, ((0, 0), (0, n_pad - n_bins)))
        b_p = jnp.pad(bias, (0, n_pad - n_bins))
    else:
        b_p = bias
    b2d = b_p.reshape(1, n_pad).astype(jnp.float32)

    # Row tile: single full-extent block for small M (no grid overhead),
    # otherwise ~even tiles of up to max_tm rows (multiple of the sublane
    # granularity).  The array need not be divisible by the tile -- the
    # boundary block is masked by Pallas, so no wrapper-side row padding.
    if m <= max_tm:
        tm = m
    else:
        n_tiles = -(-m // max_tm)
        tm = min(_round_up(-(-m // n_tiles), sublane), _round_up(m, sublane))
    grid = (pl.cdiv(m, tm),)

    itemsize_in = jnp.dtype(in_dtype).itemsize
    cost = pl.CostEstimate(
        flops=2 * m * input_dim * n_pad,
        transcendentals=0,
        bytes_accessed=(m * input_dim * itemsize_in
                        + input_dim * n_pad * itemsize_in
                        + n_pad * 4
                        + m * n_pad * jnp.dtype(out_dtype).itemsize),
    )

    out = pl.pallas_call(
        _linear_kernel,
        out_shape=jax.ShapeDtypeStruct((m, n_pad), out_dtype),
        grid_spec=pltpu.PrefetchScalarGridSpec(
            num_scalar_prefetch=0,
            grid=grid,
            in_specs=[
                # Streaming activation tile, double-buffered by the pipeline.
                pl.BlockSpec((tm, input_dim), lambda i: (i, 0)),
                # Weight / bias: resident across all M tiles.
                pl.BlockSpec((input_dim, n_pad), lambda i: (0, 0)),
                pl.BlockSpec((1, n_pad), lambda i: (0, 0)),
            ],
            out_specs=pl.BlockSpec((tm, n_pad), lambda i: (i, 0)),
        ),
        compiler_params=pltpu.CompilerParams(
            # Row tiles are independent -> shard across TCs on v7x megacore.
            dimension_semantics=("parallel",),
            # Footprint @ TM<=1024, D<=1024: double-buffered x/out tiles plus
            # resident weight << 48 MiB; raises v5e's 16 MiB scoped default
            # and stays under v7x's 64 MiB physical VMEM.
            vmem_limit_bytes=48 * 1024 * 1024,
        ),
        cost_estimate=cost,
    )(x2d, w_p, b2d)

    if return_lane_padded:
        # Downstream consumers that tolerate zero-padded lanes skip the slice
        # (saves a full read/write pass over the result).
        return out.reshape(batch, seq, n_pad)
    return out[:, :n_bins].reshape(batch, seq, n_bins)


def init_params(key, input_dim, n_bins):
    """Deterministic nn.Linear-style init (kaiming-uniform-ish bounds)."""
    kw, kb = jax.random.split(key)
    bound = 1.0 / math.sqrt(input_dim)
    # Stored as [input_dim, n_bins] (transpose of torch's [n_bins, input_dim]).
    weight = jax.random.uniform(
        kw, (input_dim, n_bins), minval=-bound, maxval=bound, dtype=jnp.float32
    )
    bias = jax.random.uniform(
        kb, (n_bins,), minval=-bound, maxval=bound, dtype=jnp.float32
    )
    return weight, bias


if __name__ == "__main__":
    key = jax.random.PRNGKey(0)

    # --- Case 1: small shapes consistent with forward() (single-block path) ---
    batch, seq, input_dim, n_bins = 2, 8, 32, 84
    k1, k2, key = jax.random.split(key, 3)
    x = jax.random.normal(k1, (batch, seq, input_dim), dtype=jnp.float32)
    weight, bias = init_params(k2, input_dim, n_bins)

    out = jax.block_until_ready(mel_pred_forward(x, weight, bias))
    ref = (x.reshape(-1, input_dim) @ weight + bias).reshape(batch, seq, n_bins)
    assert out.shape == (batch, seq, n_bins)
    assert jnp.allclose(out, ref, atol=1e-5, rtol=1e-5)

    # --- Case 2: M > tile, M not divisible by tile (masked tail-block path) ---
    batch2, seq2, input_dim2 = 3, 777, 64
    k3, k4, key = jax.random.split(key, 3)
    x2 = jax.random.normal(k3, (batch2, seq2, input_dim2), dtype=jnp.float32)
    weight2, bias2 = init_params(k4, input_dim2, n_bins)

    out2 = jax.block_until_ready(mel_pred_forward(x2, weight2, bias2))
    ref2 = (x2.reshape(-1, input_dim2) @ weight2 + bias2).reshape(
        batch2, seq2, n_bins)
    assert out2.shape == (batch2, seq2, n_bins)
    assert jnp.allclose(out2, ref2, atol=1e-4, rtol=1e-5)

    print("KERNEL_OK")
</pallas_src>

<mosaic_0001>
module attributes {stable_mosaic.version = 11 : i64} {
  func.func @_linear_kernel(%arg0: i32, %arg1: memref<16x32xf32, #tpu.memory_space<vmem>>, %arg2: memref<32x128xf32, #tpu.memory_space<vmem>>, %arg3: memref<1x128xf32, #tpu.memory_space<vmem>>, %arg4: memref<16x128xf32, #tpu.memory_space<vmem>>) attributes {dimension_semantics = [#tpu.dimension_semantics<parallel>], iteration_bounds = array<i64: 1>, scalar_prefetch = 0 : i64, scratch_operands = 0 : i64, tpu.core_type = #tpu.core_type<tc>, window_params = [{transform_indices = @transform_0, window_bounds = array<i64: 16, 32>}, {pipeline_mode = #tpu.pipeline_mode<synchronous>, transform_indices = @transform_1, window_bounds = array<i64: 32, 128>}, {pipeline_mode = #tpu.pipeline_mode<synchronous>, transform_indices = @transform_2, window_bounds = array<i64: 1, 128>}, {transform_indices = @transform_3, window_bounds = array<i64: 16, 128>}]} {
    %c0 = arith.constant 0 : index
    %c0_0 = arith.constant 0 : index
    %0 = vector.load %arg1[%c0, %c0_0] : memref<16x32xf32, #tpu.memory_space<vmem>>, vector<16x32xf32>
    %c0_1 = arith.constant 0 : index
    %c0_2 = arith.constant 0 : index
    %1 = vector.load %arg2[%c0_1, %c0_2] : memref<32x128xf32, #tpu.memory_space<vmem>>, vector<32x128xf32>
    %cst = arith.constant dense<0.000000e+00> : vector<16x128xf32>
    %2 = tpu.matmul %0, %1, %cst {dimension_numbers = #tpu.dot_dimension_numbers<[1], [0], [0], [1], [0, 0, 1, 1], [], []>} : vector<16x32xf32>, vector<32x128xf32>, vector<16x128xf32> -> vector<16x128xf32>
    %c0_3 = arith.constant 0 : index
    %c0_4 = arith.constant 0 : index
    %3 = vector.load %arg3[%c0_3, %c0_4] : memref<1x128xf32, #tpu.memory_space<vmem>>, vector<1x128xf32>
    %4 = vector.broadcast %3 : vector<1x128xf32> to vector<16x128xf32>
    %5 = arith.addf %2, %4 : vector<16x128xf32>
    %c0_5 = arith.constant 0 : index
    %c0_6 = arith.constant 0 : index
    %6 = vector.load %arg4[%c0_5, %c0_6] : memref<16x128xf32, #tpu.memory_space<vmem>>, vector<16x128xf32>
    tpu.vector_store %arg4[%c0_5, %c0_6], %5 {strides = array<i32>} : memref<16x128xf32, #tpu.memory_space<vmem>>, vector<16x128xf32>,
    return
  }
  func.func @transform_0(%arg0: i32) -> (i32, i32) {
    %c0_i32 = arith.constant 0 : i32
    %c0_i32_0 = arith.constant 0 : i32
    return %arg0, %c0_i32 : i32, i32
  }
  func.func @transform_1(%arg0: i32) -> (i32, i32) {
    %c0_i32 = arith.constant 0 : i32
    %c0_i32_0 = arith.constant 0 : i32
    %c0_i32_1 = arith.constant 0 : i32
    return %c0_i32, %c0_i32_0 : i32, i32
  }
  func.func @transform_2(%arg0: i32) -> (i32, i32) {
    %c0_i32 = arith.constant 0 : i32
    %c0_i32_0 = arith.constant 0 : i32
    %c0_i32_1 = arith.constant 0 : i32
    return %c0_i32, %c0_i32_0 : i32, i32
  }
  func.func @transform_3(%arg0: i32) -> (i32, i32) {
    %c0_i32 = arith.constant 0 : i32
    %c0_i32_0 = arith.constant 0 : i32
    return %arg0, %c0_i32 : i32, i32
  }
}

</mosaic_0001>

<llo_original>
// kernel: tpu_custom_call.1
$region0: #{tpu_custom_call.1}
  #allocation0 [shape = 'u32[]', space=smem, size = 0x4, offset = 0x4, fixed_abs, tag = 'smem constant byte address 0x4 - core index']
  #allocation1 [shape = 'u32[144,128]{1,0:T(1,128)}', space=vmem, size = 0x12000, scoped, tag = 'internal scratch']
  %s0 = inlined_call_operand.hbm [shape: f32[16,32], index: 0, kind: input, shape index: {}]
  %s1 = inlined_call_operand.hbm [shape: f32[32,128], index: 1, kind: input, shape index: {}]
  %s2 = inlined_call_operand.vmem [shape: f32[1,128], index: 2, kind: input, shape index: {}]
  %s3 = inlined_call_operand.hbm [shape: f32[16,128], index: 3, kind: output, shape index: {}]
  %s4 = sld [smem:[#allocation0]]
  $region30: #{tpu_custom_call.1} parent=0
    _
  %s6 = ssub.s32 1, %s4
  %s7 = scalar_select 0, %s6, %s4
  $region1: #{tpu_custom_call.1} parent=0
    #allocation2 [shape = 'u8[8192]{0}', space=vmem, size = 0x2000, scoped, tag = 'input window, operand 0, single buffered']
    #allocation3 [shape = 's32[1]{0}', space=sflag, size = 0x4, scoped, tag = 'scoped memory for tpu_custom_call.1']
    #allocation4 [shape = 's32[1]{0}', space=sflag, size = 0x4, scoped, tag = 'scoped memory for tpu_custom_call.1']
    #allocation5 [shape = 'u8[16384]{0}', space=vmem, size = 0x4000, scoped, tag = 'input window, operand 1, single buffered']
    #allocation6 [shape = 's32[1]{0}', space=sflag, size = 0x4, scoped, tag = 'scoped memory for tpu_custom_call.1']
    #allocation7 [shape = 'u8[8192]{0}', space=vmem, size = 0x2000, scoped, tag = 'output window, operand 0, single buffered']
    %8 = vsyncpa [#allocation3], 0
    %9 = vsyncpa [#allocation6], 0
    %10 = vsyncpa [#allocation4], 0
    // Predicated region
    $region2: #{tpu_custom_call.1} parent=1 // pred_check
      _
    $region3: #{tpu_custom_call.1} parent=1 // pred_check_branch
      %12 = sbr.rel (0) target = $region5
    $region4: #{tpu_custom_call.1} parent=1 // pred_region
      %s14 = ssub.s32 256, 256
      %15 = vsyncadd [#allocation3], %s14
      %s16 = sshll.u32 [#allocation2], 4
      %s17 = int_to_ptr.vmem [resolvable:$true] %s16
      %22 = dma.hbm_to_vmem [thread:$0]  %s0, 256, %s17, [#allocation3], 128, 128, 8
    $region5: #{tpu_custom_call.1} parent=1 // pred_fallthru
      _
    // Predicated region
    $region6: #{tpu_custom_call.1} parent=1 // pred_check
      _
    $region7: #{tpu_custom_call.1} parent=1 // pred_check_branch
      %24 = sbr.rel (0) target = $region9
    $region8: #{tpu_custom_call.1} parent=1 // pred_region
      %s26 = ssub.s32 512, 512
      %27 = vsyncadd [#allocation6], %s26
      %s28 = sshll.u32 [#allocation5], 4
      %s29 = int_to_ptr.vmem [resolvable:$true] %s28
      %34 = dma.hbm_to_vmem [thread:$0]  %s1, 512, %s29, [#allocation6], 128, 128, 8
    $region9: #{tpu_custom_call.1} parent=1 // pred_fallthru
      _
    // Predicated region
    $region10: #{tpu_custom_call.1} parent=1 // pred_check
      _
    $region11: #{tpu_custom_call.1} parent=1 // pred_check_branch
      %36 = sbr.rel (0) target = $region13
    $region12: #{tpu_custom_call.1} parent=1 // pred_region
      _
    $region13: #{tpu_custom_call.1} parent=1 // pred_fallthru
      _
    // Predicated region
    $region14: #{tpu_custom_call.1} parent=1 // pred_check
      _
    $region15: #{tpu_custom_call.1} parent=1 // pred_check_branch
      %38 = sbr.rel (0) target = $region17
    $region16: #{tpu_custom_call.1} parent=1 // pred_region
      %39 = dma.done [#allocation3], 256
    $region17: #{tpu_custom_call.1} parent=1 // pred_fallthru
      _
    // Predicated region
    $region18: #{tpu_custom_call.1} parent=1 // pred_check
      _
    $region19: #{tpu_custom_call.1} parent=1 // pred_check_branch
      %41 = sbr.rel (0) target = $region21
    $region20: #{tpu_custom_call.1} parent=1 // pred_region
      %42 = dma.done [#allocation6], 512
    $region21: #{tpu_custom_call.1} parent=1 // pred_fallthru
      _
    %v43 = vld [vmem:[#allocation2] sm:$0xff]
    %v44 = vld [vmem:[#allocation2 + $0x8] sm:$0xff]
    %v45 = vld [vmem:[#allocation5] sm:$0xff]
    %v46 = vld [vmem:[#allocation5 + $0x8] sm:$0xff]
    %v47 = vld [vmem:[#allocation5 + $0x10] sm:$0xff]
    %v48 = vld [vmem:[#allocation5 + $0x18] sm:$0xff]
    %v49 = vld [vmem:[%s2] sm:$0x1]
    %v51 = vlaneseq
    %v52 = vshrl.u32 %v51, 7
    %v53 = vsub.s32 0, %v52
    %v54 = vrot.slane %v49, %v53
    %vm56 = vcmask 261120
    %v58 = vsel %vm56, %v43, 0
    %v61 = vsel %vm56, %v44, 0
    %63 = vmatprep.subr.mxu0 0.0
    %64 = vmatpush1.msra.mxu0 0.0
    %65 = vmatprep.subr.mxu0 0.0
    %66 = vmatpush1.msra.mxu0 0.0
    %67 = vmatprep.subr.mxu0 0.0
    %68 = vmatpush1.msra.mxu0 0.0
    %69 = vmatprep.subr.mxu0 0.0
    %70 = vmatpush1.msra.mxu0 0.0
    %71 = vmatprep.subr.mxu0 0.0
    %72 = vmatpush1.msra.mxu0 0.0
    %73 = vmatprep.subr.mxu0 0.0
    %74 = vmatpush1.msra.mxu0 0.0
    %75 = vmatprep.subr.mxu0 0.0
    %76 = vmatpush1.msra.mxu0 0.0
    %77 = vmatprep.subr.mxu0 0.0
    %78 = vmatpush1.msra.mxu0 0.0
    %79 = vmatprep.subr.mxu0 0.0
    %80 = vmatpush1.msra.mxu0 0.0
    %81 = vmatprep.subr.mxu0 0.0
    %82 = vmatpush1.msra.mxu0 0.0
    %83 = vmatprep.subr.mxu0 0.0
    %84 = vmatpush1.msra.mxu0 0.0
    %85 = vmatprep.subr.mxu0 0.0
    %86 = vmatpush1.msra.mxu0 0.0
    %87 = vmatprep.subr.mxu0 0.0
    %88 = vmatpush1.msra.mxu0 %v48
    %89 = vmatprep.subr.mxu0 0.0
    %90 = vmatpush1.msra.mxu0 %v47
    %91 = vmatprep.subr.mxu0 0.0
    %92 = vmatpush1.msra.mxu0 %v46
    %93 = vmatprep.subr.mxu0 0.0
    %94 = vmatpush1.msra.mxu0 %v45
    %95 = vmatprep.subr.mxu0 0.0
    %96 = vmatpush2.msra.mxu0 0.0
    %97 = vmatprep.subr.mxu0 0.0
    %98 = vmatpush2.msra.mxu0 0.0
    %99 = vmatprep.subr.mxu0 0.0
    %100 = vmatpush2.msra.mxu0 0.0
    %101 = vmatprep.subr.mxu0 0.0
    %102 = vmatpush2.msra.mxu0 0.0
    %103 = vmatprep.subr.mxu0 0.0
    %104 = vmatpush2.msra.mxu0 0.0
    %105 = vmatprep.subr.mxu0 0.0
    %106 = vmatpush2.msra.mxu0 0.0
    %107 = vmatprep.subr.mxu0 0.0
    %108 = vmatpush2.msra.mxu0 0.0
    %109 = vmatprep.subr.mxu0 0.0
    %110 = vmatpush2.msra.mxu0 0.0
    %111 = vmatprep.subr.mxu0 0.0
    %112 = vmatpush2.msra.mxu0 0.0
    %113 = vmatprep.subr.mxu0 0.0
    %114 = vmatpush2.msra.mxu0 0.0
    %115 = vmatprep.subr.mxu0 0.0
    %116 = vmatpush2.msra.mxu0 0.0
    %117 = vmatprep.subr.mxu0 0.0
    %118 = vmatpush2.msra.mxu0 0.0
    %119 = vmatprep.subr.mxu0 0.0
    %120 = vmatpush2.msra.mxu0 0.0
    %121 = vmatprep.subr.mxu0 0.0
    %122 = vmatpush2.msra.mxu0 0.0
    %123 = vmatprep.subr.mxu0 0.0
    %124 = vmatpush2.msra.mxu0 0.0
    %125 = vmatprep.subr.mxu0 0.0
    %126 = vmatpush2.msra.mxu0 0.0
    %127 = vmatprep.mubr.f32.mxu0 0.0
    %128 = vmatmul.mubr.f32.gmra.mxu0 %v58
    %v129 = vpop.f32.mrf.mxu0
    %v130 = vadd.f32 %v54, %v129
    %v131 = vpop.f32.mrf.mxu0
    %132 = vmatprep.mubr.f32.mxu0 0.0
    %133 = vmatmul.mubr.f32.gmra.mxu0 %v61
    %v134 = vpop.f32.mrf.mxu0
    %v135 = vadd.f32 %v54, %v134
    %v136 = vpop.f32.mrf.mxu0
    %137 = vdwg.mxu0
    %138 = vst [vmem:[#allocation7] sm:$0xff] %v130
    %139 = vst [vmem:[#allocation7 + $0x8] sm:$0xff] %v135
    // Predicated region
    $region22: #{tpu_custom_call.1} parent=1 // pred_check
      _
    $region23: #{tpu_custom_call.1} parent=1 // pred_check_branch
      %141 = sbr.rel (0) target = $region25
    $region24: #{tpu_custom_call.1} parent=1 // pred_region
      %s143 = ssub.s32 256, 256
      %144 = vsyncadd [#allocation4], %s143
      %s145 = sshll.u32 [#allocation7], 4
      %s146 = int_to_ptr.vmem [resolvable:$true] %s145
      %151 = dma.vmem_to_hbm [thread:$0]  %s146, 256, %s3, [#allocation4], 128, 128, 8
    $region25: #{tpu_custom_call.1} parent=1 // pred_fallthru
      _
    // Predicated region
    $region26: #{tpu_custom_call.1} parent=1 // pred_check
      _
    $region27: #{tpu_custom_call.1} parent=1 // pred_check_branch
      %153 = sbr.rel (0) target = $region29
    $region28: #{tpu_custom_call.1} parent=1 // pred_region
      %154 = dma.done [#allocation4], 256
    $region29: #{tpu_custom_call.1} parent=1 // pred_fallthru
      _
    %155 = vsyncpa [#allocation3], 1
    %156 = vsyncpa [#allocation6], 1
    %157 = vsyncpa [#allocation4], 1

</llo_original>
